<compile_context>
chip_gen: v7x
topology: tpu7x:2x2x1
jax: 0.10.0
libtpu: 0.0.40
codegen_flags: <defaults>
</compile_context>

<pallas_src>
import functools

import jax
import jax.numpy as jnp
from jax.experimental import pallas as pl
from jax.experimental.pallas import tpu as pltpu

HIDDEN = 256      # trunk width
STREAM = 128      # per-stream hidden width
HEAD_W = 128      # lane-dense head width (>= output_dim + 1)
LN_EPS = 1e-5


def dueling_dqn_kernel(x_ref,
                       w1_ref, b1_ref, g_ref, beta_ref,
                       w2_ref, b2_ref,
                       wh1_ref, bh1_ref,      # fused [value || advantage] first layer
                       wh2_ref, bh2_ref,      # block-diagonal second layer -> [a | v | 0...]
                       q_ref,
                       *, output_dim):
    x = x_ref[...]

    # ---- feature trunk: Linear -> ReLU -> LayerNorm -> (Dropout eval) -> Linear -> ReLU
    w1 = w1_ref[...]
    h = jnp.dot(x.astype(w1.dtype), w1, preferred_element_type=jnp.float32) + b1_ref[...]
    h = jnp.maximum(h, 0.0)

    # Single-sweep LayerNorm statistics: var = E[x^2] - mu^2 (one pass over h).
    inv_n = 1.0 / HIDDEN
    s1 = jnp.sum(h, axis=-1, keepdims=True)
    s2 = jnp.sum(h * h, axis=-1, keepdims=True)
    mu = s1 * inv_n
    var = jnp.maximum(s2 * inv_n - mu * mu, 0.0)
    h = (h - mu) * jax.lax.rsqrt(var + LN_EPS)
    h = h * g_ref[...] + beta_ref[...]
    # TODO(synk): Dropout(0.1) is identity in eval mode; train-mode masking not modeled.

    w2 = w2_ref[...]
    h = jnp.dot(h.astype(w2.dtype), w2, preferred_element_type=jnp.float32) + b2_ref[...]
    h = jnp.maximum(h, 0.0)                                   # (TM, 256)

    # ---- fused value/advantage streams: one wide matmul per layer
    wh1 = wh1_ref[...]
    s = jnp.dot(h.astype(wh1.dtype), wh1, preferred_element_type=jnp.float32) + bh1_ref[...]
    s = jnp.maximum(s, 0.0)                                   # (TM, 256): [v-hidden | a-hidden]

    wh2 = wh2_ref[...]
    head = jnp.dot(s.astype(wh2.dtype), wh2, preferred_element_type=jnp.float32) + bh2_ref[...]
    # head layout (TM, HEAD_W): cols [0, D) = advantages, col D = value, rest exact zeros.

    row_sum = jnp.sum(head, axis=-1, keepdims=True)           # = sum(a) + v  (pad cols are 0)
    v = head[:, output_dim:output_dim + 1]
    a_mean = (row_sum - v) * (1.0 / output_dim)
    # q_wide[:, j] = a_j + v - mean(a) for j < D; columns >= D are junk, sliced by the wrapper.
    q_ref[...] = head + (v - a_mean)                          # lane-dense (TM, 128) store


def _round_up(n, m):
    return ((n + m - 1) // m) * m


def dueling_dqn_forward(x, kernel_params, output_dim, *, block_m=128):
    """x: (B, input_dim) f32. kernel_params: dict from pack_params().

    NOTE: for per-environment-step RL inference, batch many states per call
    (and/or keep weights resident across calls); per-call weight DMA + launch
    cost dominates at tiny batch.
    """
    B, input_dim = x.shape
    assert output_dim + 1 <= HEAD_W, "output_dim must fit in the 128-lane head"

    padded_b = _round_up(B, 8)
    tm = min(block_m, padded_b)
    padded_b = _round_up(padded_b, tm)
    if padded_b != B:
        x = jnp.pad(x, ((0, padded_b - B), (0, 0)))

    weights = (
        kernel_params["w1"], kernel_params["b1"],
        kernel_params["gamma"], kernel_params["beta"],
        kernel_params["w2"], kernel_params["b2"],
        kernel_params["wh1"], kernel_params["bh1"],
        kernel_params["wh2"], kernel_params["bh2"],
    )

    grid = (padded_b // tm,)
    x_spec = pl.BlockSpec((tm, input_dim), lambda i: (i, 0))
    # Constant block index => weights stay VMEM-resident across the batch grid.
    w_specs = [pl.BlockSpec(w.shape, lambda i: (0, 0)) for w in weights]
    out_spec = pl.BlockSpec((tm, HEAD_W), lambda i: (i, 0))

    q_wide = pl.pallas_call(
        functools.partial(dueling_dqn_kernel, output_dim=output_dim),
        out_shape=jax.ShapeDtypeStruct((padded_b, HEAD_W), jnp.float32),
        grid=grid,
        in_specs=[x_spec] + w_specs,
        out_specs=out_spec,
        compiler_params=pltpu.CompilerParams(
            dimension_semantics=("parallel",)),   # batch axis shards across v7x's 2 TCs
    )(x, *weights)

    return q_wide[:B, :output_dim]


def init_params(key, input_dim, output_dim):
    """Deterministic synthetic parameters (shapes match the PyTorch module, weights
    stored transposed as (in, out))."""
    ks = jax.random.split(key, 12)
    s = 0.05

    def lin(kw, kb, fan_in, fan_out):
        w = jax.random.normal(kw, (fan_in, fan_out), jnp.float32) * s
        b = jax.random.normal(kb, (1, fan_out), jnp.float32) * s
        return w, b

    w1, b1 = lin(ks[0], ks[1], input_dim, HIDDEN)
    w2, b2 = lin(ks[2], ks[3], HIDDEN, HIDDEN)
    wv1, bv1 = lin(ks[4], ks[5], HIDDEN, STREAM)
    wv2, bv2 = lin(ks[6], ks[7], STREAM, 1)
    wa1, ba1 = lin(ks[8], ks[9], HIDDEN, STREAM)
    wa2, ba2 = lin(ks[10], ks[11], STREAM, output_dim)

    return dict(
        w1=w1, b1=b1,
        gamma=jnp.ones((1, HIDDEN), jnp.float32),
        beta=jnp.zeros((1, HIDDEN), jnp.float32),
        w2=w2, b2=b2,
        wv1=wv1, bv1=bv1, wv2=wv2, bv2=bv2,
        wa1=wa1, ba1=ba1, wa2=wa2, ba2=ba2,
    )


def pack_params(p, output_dim, *, matmul_dtype=jnp.float32):
    """Fuse / pad per-layer params into the kernel operand layout.

    matmul_dtype=jnp.bfloat16 on v6e/v7x halves weight DMA bytes and doubles
    MXU throughput; accumulation and all VPU work stay float32.
    """
    D = output_dim
    # Fused first head layer: columns [0,128) -> value hidden, [128,256) -> advantage hidden.
    wh1 = jnp.concatenate([p["wv1"], p["wa1"]], axis=1)          # (256, 256)
    bh1 = jnp.concatenate([p["bv1"], p["ba1"]], axis=1)          # (1, 256)
    # Block-diagonal second head layer, zero-padded to HEAD_W lanes:
    #   cols [0, D)      <- advantages (from adv-hidden rows 128:256)
    #   col  D           <- value      (from value-hidden rows 0:128)
    #   cols (D, HEAD_W) <- exact zeros (so a full-lane row-sum = sum(a) + v)
    wh2 = jnp.zeros((2 * STREAM, HEAD_W), jnp.float32)
    wh2 = wh2.at[STREAM:, :D].set(p["wa2"])
    wh2 = wh2.at[:STREAM, D:D + 1].set(p["wv2"])
    bh2 = jnp.zeros((1, HEAD_W), jnp.float32)
    bh2 = bh2.at[:, :D].set(p["ba2"])
    bh2 = bh2.at[:, D:D + 1].set(p["bv2"])

    cast = lambda w: w.astype(matmul_dtype)
    return dict(
        w1=cast(p["w1"]), b1=p["b1"], gamma=p["gamma"], beta=p["beta"],
        w2=cast(p["w2"]), b2=p["b2"],
        wh1=cast(wh1), bh1=bh1,
        wh2=cast(wh2), bh2=bh2,
    )


def reference_forward(x, p):
    """Pure-JAX reference (mirrors the PyTorch forward in eval mode)."""
    h = jnp.maximum(x @ p["w1"] + p["b1"], 0.0)
    mu = jnp.mean(h, axis=-1, keepdims=True)
    var = jnp.mean((h - mu) ** 2, axis=-1, keepdims=True)
    h = (h - mu) / jnp.sqrt(var + LN_EPS) * p["gamma"] + p["beta"]
    h = jnp.maximum(h @ p["w2"] + p["b2"], 0.0)
    v = jnp.maximum(h @ p["wv1"] + p["bv1"], 0.0) @ p["wv2"] + p["bv2"]
    a = jnp.maximum(h @ p["wa1"] + p["ba1"], 0.0) @ p["wa2"] + p["ba2"]
    return v + a - jnp.mean(a, axis=1, keepdims=True)


if __name__ == "__main__":
    B, input_dim, output_dim = 8, 32, 8

    key = jax.random.PRNGKey(0)
    k_x, k_p, k_x2 = jax.random.split(key, 3)
    x = jax.random.normal(k_x, (B, input_dim), jnp.float32)
    params = init_params(k_p, input_dim, output_dim)
    q_ref = reference_forward(x, params)

    # f32 weights: single-block path
    kp_f32 = pack_params(params, output_dim)
    q = jax.block_until_ready(dueling_dqn_forward(x, kp_f32, output_dim))
    assert q.shape == (B, output_dim)
    assert jnp.allclose(q, q_ref, atol=1e-4, rtol=1e-4), "f32 kernel mismatch vs reference"

    # Multi-block batch grid (exercises padding + pipelined tiles, grid=(2,))
    B2 = 130
    x2 = jax.random.normal(k_x2, (B2, input_dim), jnp.float32)
    q2 = jax.block_until_ready(dueling_dqn_forward(x2, kp_f32, output_dim))
    q2_ref = reference_forward(x2, params)
    assert q2.shape == (B2, output_dim)
    assert jnp.allclose(q2, q2_ref, atol=1e-4, rtol=1e-4), "tiled kernel mismatch vs reference"

    # bf16 matmul operands (v6e/v7x MXU-native), f32 accumulation; looser tolerance
    kp_bf16 = pack_params(params, output_dim, matmul_dtype=jnp.bfloat16)
    q_bf16 = jax.block_until_ready(dueling_dqn_forward(x, kp_bf16, output_dim))
    assert jnp.allclose(q_bf16, q_ref, atol=3e-2, rtol=3e-2), "bf16 kernel mismatch vs reference"

    print("KERNEL_OK")
</pallas_src>

<mosaic_0001>
module attributes {stable_mosaic.version = 11 : i64} {
  func.func @dueling_dqn_kernel(%arg0: i32, %arg1: memref<8x32xf32, #tpu.memory_space<vmem>>, %arg2: memref<32x256xf32, #tpu.memory_space<vmem>>, %arg3: memref<1x256xf32, #tpu.memory_space<vmem>>, %arg4: memref<1x256xf32, #tpu.memory_space<vmem>>, %arg5: memref<1x256xf32, #tpu.memory_space<vmem>>, %arg6: memref<256x256xf32, #tpu.memory_space<vmem>>, %arg7: memref<1x256xf32, #tpu.memory_space<vmem>>, %arg8: memref<256x256xf32, #tpu.memory_space<vmem>>, %arg9: memref<1x256xf32, #tpu.memory_space<vmem>>, %arg10: memref<256x128xf32, #tpu.memory_space<vmem>>, %arg11: memref<1x128xf32, #tpu.memory_space<vmem>>, %arg12: memref<8x128xf32, #tpu.memory_space<vmem>>) attributes {dimension_semantics = [#tpu.dimension_semantics<parallel>], iteration_bounds = array<i64: 1>, scalar_prefetch = 0 : i64, scratch_operands = 0 : i64, tpu.core_type = #tpu.core_type<tc>, window_params = [{transform_indices = @transform_0, window_bounds = array<i64: 8, 32>}, {pipeline_mode = #tpu.pipeline_mode<synchronous>, transform_indices = @transform_1, window_bounds = array<i64: 32, 256>}, {pipeline_mode = #tpu.pipeline_mode<synchronous>, transform_indices = @transform_2, window_bounds = array<i64: 1, 256>}, {pipeline_mode = #tpu.pipeline_mode<synchronous>, transform_indices = @transform_3, window_bounds = array<i64: 1, 256>}, {pipeline_mode = #tpu.pipeline_mode<synchronous>, transform_indices = @transform_4, window_bounds = array<i64: 1, 256>}, {pipeline_mode = #tpu.pipeline_mode<synchronous>, transform_indices = @transform_5, window_bounds = array<i64: 256, 256>}, {pipeline_mode = #tpu.pipeline_mode<synchronous>, transform_indices = @transform_6, window_bounds = array<i64: 1, 256>}, {pipeline_mode = #tpu.pipeline_mode<synchronous>, transform_indices = @transform_7, window_bounds = array<i64: 256, 256>}, {pipeline_mode = #tpu.pipeline_mode<synchronous>, transform_indices = @transform_8, window_bounds = array<i64: 1, 256>}, {pipeline_mode = #tpu.pipeline_mode<synchronous>, transform_indices = @transform_9, window_bounds = array<i64: 256, 128>}, {pipeline_mode = #tpu.pipeline_mode<synchronous>, transform_indices = @transform_10, window_bounds = array<i64: 1, 128>}, {transform_indices = @transform_11, window_bounds = array<i64: 8, 128>}]} {
    %c0 = arith.constant 0 : index
    %c0_0 = arith.constant 0 : index
    %0 = vector.load %arg1[%c0, %c0_0] : memref<8x32xf32, #tpu.memory_space<vmem>>, vector<8x32xf32>
    %c0_1 = arith.constant 0 : index
    %c0_2 = arith.constant 0 : index
    %1 = vector.load %arg2[%c0_1, %c0_2] : memref<32x256xf32, #tpu.memory_space<vmem>>, vector<32x256xf32>
    %cst = arith.constant dense<0.000000e+00> : vector<8x256xf32>
    %2 = tpu.matmul %0, %1, %cst {dimension_numbers = #tpu.dot_dimension_numbers<[1], [0], [0], [1], [0, 0, 1, 1], [], []>} : vector<8x32xf32>, vector<32x256xf32>, vector<8x256xf32> -> vector<8x256xf32>
    %c0_3 = arith.constant 0 : index
    %c0_4 = arith.constant 0 : index
    %3 = vector.load %arg3[%c0_3, %c0_4] : memref<1x256xf32, #tpu.memory_space<vmem>>, vector<1x256xf32>
    %4 = vector.broadcast %3 : vector<1x256xf32> to vector<8x256xf32>
    %5 = arith.addf %2, %4 : vector<8x256xf32>
    %cst_5 = arith.constant 0.000000e+00 : f32
    %6 = vector.broadcast %cst_5 : f32 to vector<8x256xf32>
    %7 = arith.maximumf %5, %6 : vector<8x256xf32>
    %cst_6 = arith.constant dense<0.000000e+00> : vector<8xf32>
    %8 = vector.multi_reduction <add>, %7, %cst_6 [1] : vector<8x256xf32> to vector<8xf32>
    %9 = vector.shape_cast %8 : vector<8xf32> to vector<8x1xf32>
    %10 = arith.mulf %7, %7 : vector<8x256xf32>
    %cst_7 = arith.constant dense<0.000000e+00> : vector<8xf32>
    %11 = vector.multi_reduction <add>, %10, %cst_7 [1] : vector<8x256xf32> to vector<8xf32>
    %12 = vector.shape_cast %11 : vector<8xf32> to vector<8x1xf32>
    %cst_8 = arith.constant 3.906250e-03 : f32
    %13 = vector.broadcast %cst_8 : f32 to vector<8x1xf32>
    %14 = arith.mulf %9, %13 : vector<8x1xf32>
    %cst_9 = arith.constant 3.906250e-03 : f32
    %15 = vector.broadcast %cst_9 : f32 to vector<8x1xf32>
    %16 = arith.mulf %12, %15 : vector<8x1xf32>
    %17 = arith.mulf %14, %14 : vector<8x1xf32>
    %18 = arith.subf %16, %17 : vector<8x1xf32>
    %cst_10 = arith.constant 0.000000e+00 : f32
    %19 = vector.broadcast %cst_10 : f32 to vector<8x1xf32>
    %20 = arith.maximumf %18, %19 : vector<8x1xf32>
    %21 = vector.broadcast %14 : vector<8x1xf32> to vector<8x256xf32>
    %22 = arith.subf %7, %21 : vector<8x256xf32>
    %cst_11 = arith.constant 9.99999974E-6 : f32
    %23 = vector.broadcast %cst_11 : f32 to vector<8x1xf32>
    %24 = arith.addf %20, %23 : vector<8x1xf32>
    %25 = math.rsqrt %24 : vector<8x1xf32>
    %26 = vector.broadcast %25 : vector<8x1xf32> to vector<8x256xf32>
    %27 = arith.mulf %22, %26 : vector<8x256xf32>
    %c0_12 = arith.constant 0 : index
    %c0_13 = arith.constant 0 : index
    %28 = vector.load %arg4[%c0_12, %c0_13] : memref<1x256xf32, #tpu.memory_space<vmem>>, vector<1x256xf32>
    %29 = vector.broadcast %28 : vector<1x256xf32> to vector<8x256xf32>
    %30 = arith.mulf %27, %29 : vector<8x256xf32>
    %c0_14 = arith.constant 0 : index
    %c0_15 = arith.constant 0 : index
    %31 = vector.load %arg5[%c0_14, %c0_15] : memref<1x256xf32, #tpu.memory_space<vmem>>, vector<1x256xf32>
    %32 = vector.broadcast %31 : vector<1x256xf32> to vector<8x256xf32>
    %33 = arith.addf %30, %32 : vector<8x256xf32>
    %c0_16 = arith.constant 0 : index
    %c0_17 = arith.constant 0 : index
    %34 = vector.load %arg6[%c0_16, %c0_17] : memref<256x256xf32, #tpu.memory_space<vmem>>, vector<256x256xf32>
    %cst_18 = arith.constant dense<0.000000e+00> : vector<8x256xf32>
    %35 = tpu.matmul %33, %34, %cst_18 {dimension_numbers = #tpu.dot_dimension_numbers<[1], [0], [0], [1], [0, 0, 1, 1], [], []>} : vector<8x256xf32>, vector<256x256xf32>, vector<8x256xf32> -> vector<8x256xf32>
    %c0_19 = arith.constant 0 : index
    %c0_20 = arith.constant 0 : index
    %36 = vector.load %arg7[%c0_19, %c0_20] : memref<1x256xf32, #tpu.memory_space<vmem>>, vector<1x256xf32>
    %37 = vector.broadcast %36 : vector<1x256xf32> to vector<8x256xf32>
    %38 = arith.addf %35, %37 : vector<8x256xf32>
    %cst_21 = arith.constant 0.000000e+00 : f32
    %39 = vector.broadcast %cst_21 : f32 to vector<8x256xf32>
    %40 = arith.maximumf %38, %39 : vector<8x256xf32>
    %c0_22 = arith.constant 0 : index
    %c0_23 = arith.constant 0 : index
    %41 = vector.load %arg8[%c0_22, %c0_23] : memref<256x256xf32, #tpu.memory_space<vmem>>, vector<256x256xf32>
    %cst_24 = arith.constant dense<0.000000e+00> : vector<8x256xf32>
    %42 = tpu.matmul %40, %41, %cst_24 {dimension_numbers = #tpu.dot_dimension_numbers<[1], [0], [0], [1], [0, 0, 1, 1], [], []>} : vector<8x256xf32>, vector<256x256xf32>, vector<8x256xf32> -> vector<8x256xf32>
    %c0_25 = arith.constant 0 : index
    %c0_26 = arith.constant 0 : index
    %43 = vector.load %arg9[%c0_25, %c0_26] : memref<1x256xf32, #tpu.memory_space<vmem>>, vector<1x256xf32>
    %44 = vector.broadcast %43 : vector<1x256xf32> to vector<8x256xf32>
    %45 = arith.addf %42, %44 : vector<8x256xf32>
    %cst_27 = arith.constant 0.000000e+00 : f32
    %46 = vector.broadcast %cst_27 : f32 to vector<8x256xf32>
    %47 = arith.maximumf %45, %46 : vector<8x256xf32>
    %c0_28 = arith.constant 0 : index
    %c0_29 = arith.constant 0 : index
    %48 = vector.load %arg10[%c0_28, %c0_29] : memref<256x128xf32, #tpu.memory_space<vmem>>, vector<256x128xf32>
    %cst_30 = arith.constant dense<0.000000e+00> : vector<8x128xf32>
    %49 = tpu.matmul %47, %48, %cst_30 {dimension_numbers = #tpu.dot_dimension_numbers<[1], [0], [0], [1], [0, 0, 1, 1], [], []>} : vector<8x256xf32>, vector<256x128xf32>, vector<8x128xf32> -> vector<8x128xf32>
    %c0_31 = arith.constant 0 : index
    %c0_32 = arith.constant 0 : index
    %50 = vector.load %arg11[%c0_31, %c0_32] : memref<1x128xf32, #tpu.memory_space<vmem>>, vector<1x128xf32>
    %51 = vector.broadcast %50 : vector<1x128xf32> to vector<8x128xf32>
    %52 = arith.addf %49, %51 : vector<8x128xf32>
    %cst_33 = arith.constant dense<0.000000e+00> : vector<8xf32>
    %53 = vector.multi_reduction <add>, %52, %cst_33 [1] : vector<8x128xf32> to vector<8xf32>
    %54 = vector.shape_cast %53 : vector<8xf32> to vector<8x1xf32>
    %55 = vector.extract_strided_slice %52 {offsets = [0, 8], sizes = [8, 1], strides = [1, 1]} : vector<8x128xf32> to vector<8x1xf32>
    %56 = arith.subf %54, %55 : vector<8x1xf32>
    %cst_34 = arith.constant 1.250000e-01 : f32
    %57 = vector.broadcast %cst_34 : f32 to vector<8x1xf32>
    %58 = arith.mulf %56, %57 : vector<8x1xf32>
    %59 = arith.subf %55, %58 : vector<8x1xf32>
    %60 = vector.broadcast %59 : vector<8x1xf32> to vector<8x128xf32>
    %61 = arith.addf %52, %60 : vector<8x128xf32>
    %c0_35 = arith.constant 0 : index
    %c0_36 = arith.constant 0 : index
    %62 = vector.load %arg12[%c0_35, %c0_36] : memref<8x128xf32, #tpu.memory_space<vmem>>, vector<8x128xf32>
    tpu.vector_store %arg12[%c0_35, %c0_36], %61 {strides = array<i32>} : memref<8x128xf32, #tpu.memory_space<vmem>>, vector<8x128xf32>,
    return
  }
  func.func @transform_0(%arg0: i32) -> (i32, i32) {
    %c0_i32 = arith.constant 0 : i32
    %c0_i32_0 = arith.constant 0 : i32
    return %arg0, %c0_i32 : i32, i32
  }
  func.func @transform_1(%arg0: i32) -> (i32, i32) {
    %c0_i32 = arith.constant 0 : i32
    %c0_i32_0 = arith.constant 0 : i32
    %c0_i32_1 = arith.constant 0 : i32
    return %c0_i32, %c0_i32_0 : i32, i32
  }
  func.func @transform_2(%arg0: i32) -> (i32, i32) {
    %c0_i32 = arith.constant 0 : i32
    %c0_i32_0 = arith.constant 0 : i32
    %c0_i32_1 = arith.constant 0 : i32
    return %c0_i32, %c0_i32_0 : i32, i32
  }
  func.func @transform_3(%arg0: i32) -> (i32, i32) {
    %c0_i32 = arith.constant 0 : i32
    %c0_i32_0 = arith.constant 0 : i32
    %c0_i32_1 = arith.constant 0 : i32
    return %c0_i32, %c0_i32_0 : i32, i32
  }
  func.func @transform_4(%arg0: i32) -> (i32, i32) {
    %c0_i32 = arith.constant 0 : i32
    %c0_i32_0 = arith.constant 0 : i32
    %c0_i32_1 = arith.constant 0 : i32
    return %c0_i32, %c0_i32_0 : i32, i32
  }
  func.func @transform_5(%arg0: i32) -> (i32, i32) {
    %c0_i32 = arith.constant 0 : i32
    %c0_i32_0 = arith.constant 0 : i32
    %c0_i32_1 = arith.constant 0 : i32
    return %c0_i32, %c0_i32_0 : i32, i32
  }
  func.func @transform_6(%arg0: i32) -> (i32, i32) {
    %c0_i32 = arith.constant 0 : i32
    %c0_i32_0 = arith.constant 0 : i32
    %c0_i32_1 = arith.constant 0 : i32
    return %c0_i32, %c0_i32_0 : i32, i32
  }
  func.func @transform_7(%arg0: i32) -> (i32, i32) {
    %c0_i32 = arith.constant 0 : i32
    %c0_i32_0 = arith.constant 0 : i32
    %c0_i32_1 = arith.constant 0 : i32
    return %c0_i32, %c0_i32_0 : i32, i32
  }
  func.func @transform_8(%arg0: i32) -> (i32, i32) {
    %c0_i32 = arith.constant 0 : i32
    %c0_i32_0 = arith.constant 0 : i32
    %c0_i32_1 = arith.constant 0 : i32
    return %c0_i32, %c0_i32_0 : i32, i32
  }
  func.func @transform_9(%arg0: i32) -> (i32, i32) {
    %c0_i32 = arith.constant 0 : i32
    %c0_i32_0 = arith.constant 0 : i32
    %c0_i32_1 = arith.constant 0 : i32
    return %c0_i32, %c0_i32_0 : i32, i32
  }
  func.func @transform_10(%arg0: i32) -> (i32, i32) {
    %c0_i32 = arith.constant 0 : i32
    %c0_i32_0 = arith.constant 0 : i32
    %c0_i32_1 = arith.constant 0 : i32
    return %c0_i32, %c0_i32_0 : i32, i32
  }
  func.func @transform_11(%arg0: i32) -> (i32, i32) {
    %c0_i32 = arith.constant 0 : i32
    %c0_i32_0 = arith.constant 0 : i32
    return %arg0, %c0_i32 : i32, i32
  }
}

</mosaic_0001>

<llo_original>
// kernel: tpu_custom_call.1
$region0: #{tpu_custom_call.1}
  #allocation0 [shape = 'u32[]', space=smem, size = 0x4, offset = 0x4, fixed_abs, tag = 'smem constant byte address 0x4 - core index']
  #allocation1 [shape = 'u32[144,128]{1,0:T(1,128)}', space=vmem, size = 0x12000, scoped, tag = 'internal scratch']
  %s0 = inlined_call_operand.hbm [shape: f32[8,32], index: 0, kind: input, shape index: {}]
  %s1 = inlined_call_operand.hbm [shape: f32[32,256], index: 1, kind: input, shape index: {}]
  %s2 = inlined_call_operand.vmem [shape: f32[1,256], index: 2, kind: input, shape index: {}]
  %s3 = inlined_call_operand.vmem [shape: f32[1,256], index: 3, kind: input, shape index: {}]
  %s4 = inlined_call_operand.vmem [shape: f32[1,256], index: 4, kind: input, shape index: {}]
  %s5 = inlined_call_operand.hbm [shape: f32[256,256], index: 5, kind: input, shape index: {}]
  %s6 = inlined_call_operand.vmem [shape: f32[1,256], index: 6, kind: input, shape index: {}]
  %s7 = inlined_call_operand.hbm [shape: f32[256,256], index: 7, kind: input, shape index: {}]
  %s8 = inlined_call_operand.vmem [shape: f32[1,256], index: 8, kind: input, shape index: {}]
  %s9 = inlined_call_operand.hbm [shape: f32[256,128], index: 9, kind: input, shape index: {}]
  %s10 = inlined_call_operand.vmem [shape: f32[1,128], index: 10, kind: input, shape index: {}]
  %s11 = inlined_call_operand.hbm [shape: f32[8,128], index: 11, kind: output, shape index: {}]
  %s12 = sld [smem:[#allocation0]]
  $region74: #{tpu_custom_call.1} parent=0
    _
  %s14 = ssub.s32 1, %s12
  %s15 = scalar_select 0, %s14, %s12
  $region1: #{tpu_custom_call.1} parent=0
    #allocation2 [shape = 'u8[4096]{0}', space=vmem, size = 0x1000, scoped, tag = 'input window, operand 0, single buffered']
    #allocation3 [shape = 's32[1]{0}', space=sflag, size = 0x4, scoped, tag = 'scoped memory for tpu_custom_call.1']
    #allocation4 [shape = 's32[1]{0}', space=sflag, size = 0x4, scoped, tag = 'scoped memory for tpu_custom_call.1']
    #allocation5 [shape = 'u8[32768]{0}', space=vmem, size = 0x8000, scoped, tag = 'input window, operand 1, single buffered']
    #allocation6 [shape = 's32[1]{0}', space=sflag, size = 0x4, scoped, tag = 'scoped memory for tpu_custom_call.1']
    #allocation7 [shape = 'u8[262144]{0}', space=vmem, size = 0x40000, scoped, tag = 'input window, operand 5, single buffered']
    #allocation8 [shape = 'u8[262144]{0}', space=vmem, size = 0x40000, scoped, tag = 'input window, operand 7, single buffered']
    #allocation9 [shape = 's32[1]{0}', space=sflag, size = 0x4, scoped, tag = 'scoped memory for tpu_custom_call.1']
    #allocation10 [shape = 'u8[131072]{0}', space=vmem, size = 0x20000, scoped, tag = 'input window, operand 9, single buffered']
    #allocation11 [shape = 'u8[4096]{0}', space=vmem, size = 0x1000, scoped, tag = 'output window, operand 0, single buffered']
    %16 = vsyncpa [#allocation3], 0
    %17 = vsyncpa [#allocation6], 0
    %18 = vsyncpa [#allocation9], 0
    %19 = vsyncpa [#allocation4], 0
    // Predicated region
    $region2: #{tpu_custom_call.1} parent=1 // pred_check
      _
    $region3: #{tpu_custom_call.1} parent=1 // pred_check_branch
      %21 = sbr.rel (0) target = $region5
    $region4: #{tpu_custom_call.1} parent=1 // pred_region
      %s23 = ssub.s32 128, 128
      %24 = vsyncadd [#allocation3], %s23
      %s26 = sshll.u32 [#allocation2], 4
      %s27 = int_to_ptr.vmem [resolvable:$true] %s26
      %29 = dma.hbm_to_vmem [thread:$0]  %s0, 128, %s27, [#allocation3]
    $region5: #{tpu_custom_call.1} parent=1 // pred_fallthru
      _
    // Predicated region
    $region6: #{tpu_custom_call.1} parent=1 // pred_check
      _
    $region7: #{tpu_custom_call.1} parent=1 // pred_check_branch
      %31 = sbr.rel (0) target = $region9
    $region8: #{tpu_custom_call.1} parent=1 // pred_region
      %s33 = ssub.s32 1024, 1024
      %34 = vsyncadd [#allocation6], %s33
      %s35 = sshll.u32 [#allocation5], 4
      %s36 = int_to_ptr.vmem [resolvable:$true] %s35
      %41 = dma.hbm_to_vmem [thread:$0]  %s1, 1024, %s36, [#allocation6], 256, 256, 16
    $region9: #{tpu_custom_call.1} parent=1 // pred_fallthru
      _
    // Predicated region
    $region10: #{tpu_custom_call.1} parent=1 // pred_check
      _
    $region11: #{tpu_custom_call.1} parent=1 // pred_check_branch
      %43 = sbr.rel (0) target = $region13
    $region12: #{tpu_custom_call.1} parent=1 // pred_region
      _
    $region13: #{tpu_custom_call.1} parent=1 // pred_fallthru
      _
    // Predicated region
    $region14: #{tpu_custom_call.1} parent=1 // pred_check
      _
    $region15: #{tpu_custom_call.1} parent=1 // pred_check_branch
      %45 = sbr.rel (0) target = $region17
    $region16: #{tpu_custom_call.1} parent=1 // pred_region
      _
    $region17: #{tpu_custom_call.1} parent=1 // pred_fallthru
      _
    // Predicated region
    $region18: #{tpu_custom_call.1} parent=1 // pred_check
      _
    $region19: #{tpu_custom_call.1} parent=1 // pred_check_branch
      %47 = sbr.rel (0) target = $region21
    $region20: #{tpu_custom_call.1} parent=1 // pred_region
      _
    $region21: #{tpu_custom_call.1} parent=1 // pred_fallthru
      _
    // Predicated region
    $region22: #{tpu_custom_call.1} parent=1 // pred_check
      _
    $region23: #{tpu_custom_call.1} parent=1 // pred_check_branch
      %49 = sbr.rel (0) target = $region25
    $region24: #{tpu_custom_call.1} parent=1 // pred_region
      %s51 = ssub.s32 8192, 8192
      %52 = vsyncadd [#allocation6], %s51
      %s53 = sshll.u32 [#allocation7], 4
      %s54 = int_to_ptr.vmem [resolvable:$true] %s53
      %59 = dma.hbm_to_vmem [thread:$0]  %s5, 8192, %s54, [#allocation6], 256, 256, 16
    $region25: #{tpu_custom_call.1} parent=1 // pred_fallthru
      _
    // Predicated region
    $region26: #{tpu_custom_call.1} parent=1 // pred_check
      _
    $region27: #{tpu_custom_call.1} parent=1 // pred_check_branch
      %61 = sbr.rel (0) target = $region29
    $region28: #{tpu_custom_call.1} parent=1 // pred_region
      _
    $region29: #{tpu_custom_call.1} parent=1 // pred_fallthru
      _
    // Predicated region
    $region30: #{tpu_custom_call.1} parent=1 // pred_check
      _
    $region31: #{tpu_custom_call.1} parent=1 // pred_check_branch
      %63 = sbr.rel (0) target = $region33
    $region32: #{tpu_custom_call.1} parent=1 // pred_region
      %s65 = ssub.s32 8192, 8192
      %66 = vsyncadd [#allocation9], %s65
      %s67 = sshll.u32 [#allocation8], 4
      %s68 = int_to_ptr.vmem [resolvable:$true] %s67
      %73 = dma.hbm_to_vmem [thread:$0]  %s7, 8192, %s68, [#allocation9], 256, 256, 16
    $region33: #{tpu_custom_call.1} parent=1 // pred_fallthru
      _
    // Predicated region
    $region34: #{tpu_custom_call.1} parent=1 // pred_check
      _
    $region35: #{tpu_custom_call.1} parent=1 // pred_check_branch
      %75 = sbr.rel (0) target = $region37
    $region36: #{tpu_custom_call.1} parent=1 // pred_region
      _
    $region37: #{tpu_custom_call.1} parent=1 // pred_fallthru
      _
    // Predicated region
    $region38: #{tpu_custom_call.1} parent=1 // pred_check
      _
    $region39: #{tpu_custom_call.1} parent=1 // pred_check_branch
      %77 = sbr.rel (0) target = $region41
    $region40: #{tpu_custom_call.1} parent=1 // pred_region
      %s79 = ssub.s32 4096, 4096
      %80 = vsyncadd [#allocation9], %s79
      %s81 = sshll.u32 [#allocation10], 4
      %s82 = int_to_ptr.vmem [resolvable:$true] %s81
      %87 = dma.hbm_to_vmem [thread:$0]  %s9, 4096, %s82, [#allocation9], 128, 128, 8
    $region41: #{tpu_custom_call.1} parent=1 // pred_fallthru
      _
    // Predicated region
    $region42: #{tpu_custom_call.1} parent=1 // pred_check
      _
    $region43: #{tpu_custom_call.1} parent=1 // pred_check_branch
      %89 = sbr.rel (0) target = $region45
    $region44: #{tpu_custom_call.1} parent=1 // pred_region
      _
    $region45: #{tpu_custom_call.1} parent=1 // pred_fallthru
      _
    // Predicated region
    $region46: #{tpu_custom_call.1} parent=1 // pred_check
      _
    $region47: #{tpu_custom_call.1} parent=1 // pred_check_branch
      %91 = sbr.rel (0) target = $region49
    $region48: #{tpu_custom_call.1} parent=1 // pred_region
      %92 = dma.done [#allocation3], 128
    $region49: #{tpu_custom_call.1} parent=1 // pred_fallthru
      _
    // Predicated region
    $region50: #{tpu_custom_call.1} parent=1 // pred_check
      _
    $region51: #{tpu_custom_call.1} parent=1 // pred_check_branch
      %94 = sbr.rel (0) target = $region53
    $region52: #{tpu_custom_call.1} parent=1 // pred_region
      %95 = dma.done [#allocation6], 1024
    $region53: #{tpu_custom_call.1} parent=1 // pred_fallthru
      _
    // Predicated region
    $region54: #{tpu_custom_call.1} parent=1 // pred_check
      _
    $region55: #{tpu_custom_call.1} parent=1 // pred_check_branch
      %97 = sbr.rel (0) target = $region57
    $region56: #{tpu_custom_call.1} parent=1 // pred_region
      %98 = dma.done [#allocation6], 8192
    $region57: #{tpu_custom_call.1} parent=1 // pred_fallthru
      _
    // Predicated region
    $region58: #{tpu_custom_call.1} parent=1 // pred_check
      _
    $region59: #{tpu_custom_call.1} parent=1 // pred_check_branch
      %100 = sbr.rel (0) target = $region61
    $region60: #{tpu_custom_call.1} parent=1 // pred_region
      %101 = dma.done [#allocation9], 8192
    $region61: #{tpu_custom_call.1} parent=1 // pred_fallthru
      _
    // Predicated region
    $region62: #{tpu_custom_call.1} parent=1 // pred_check
      _
    $region63: #{tpu_custom_call.1} parent=1 // pred_check_branch
      %103 = sbr.rel (0) target = $region65
    $region64: #{tpu_custom_call.1} parent=1 // pred_region
      %104 = dma.done [#allocation9], 4096
    $region65: #{tpu_custom_call.1} parent=1 // pred_fallthru
      _
    %v105 = vld [vmem:[#allocation2] sm:$0xff]
    %v106 = vld [vmem:[#allocation5] sm:$0xff]
    %v107 = vld [vmem:[#allocation5 + $0x8] sm:$0xff]
    %v108 = vld [vmem:[#allocation5 + $0x10] sm:$0xff]
    %v109 = vld [vmem:[#allocation5 + $0x18] sm:$0xff]
    %v110 = vld [vmem:[#allocation5 + $0x20] sm:$0xff]
    %v111 = vld [vmem:[#allocation5 + $0x28] sm:$0xff]
    %v112 = vld [vmem:[#allocation5 + $0x30] sm:$0xff]
    %v113 = vld [vmem:[#allocation5 + $0x38] sm:$0xff]
    %v114 = vld [vmem:[%s2] sm:$0x3]
    %v116 = vlaneseq
    %v117 = vshrl.u32 %v116, 7
    %v118 = vsub.s32 0, %v117
    %v119 = vrot.slane %v114, %v118
    %v120 = vlaneseq
    %v121 = vshrl.u32 %v120, 7
    %v122 = vsub.s32 1, %v121
    %v123 = vrot.slane %v114, %v122
    %vm126 = vcmask 261120
    %v128 = vsel %vm126, %v105, 0
    %130 = vmatprep.subr.mxu0 %v107
    %131 = vmatpush1.msra.mxu0 %v106
    %132 = vmatprep.subr.mxu0 %v109
    %133 = vmatpush1.msra.mxu0 %v108
    %134 = vmatprep.subr.mxu0 %v111
    %135 = vmatpush1.msra.mxu0 %v110
    %136 = vmatprep.subr.mxu0 %v113
    %137 = vmatpush1.msra.mxu0 %v112
    %138 = vmatprep.subr.mxu0 0.0
    %139 = vmatpush1.msra.mxu0 0.0
    %140 = vmatprep.subr.mxu0 0.0
    %141 = vmatpush1.msra.mxu0 0.0
    %142 = vmatprep.subr.mxu0 0.0
    %143 = vmatpush1.msra.mxu0 0.0
    %144 = vmatprep.subr.mxu0 0.0
    %145 = vmatpush1.msra.mxu0 0.0
    %146 = vmatprep.subr.mxu0 0.0
    %147 = vmatpush1.msra.mxu0 0.0
    %148 = vmatprep.subr.mxu0 0.0
    %149 = vmatpush1.msra.mxu0 0.0
    %150 = vmatprep.subr.mxu0 0.0
    %151 = vmatpush1.msra.mxu0 0.0
    %152 = vmatprep.subr.mxu0 0.0
    %153 = vmatpush1.msra.mxu0 0.0
    %154 = vmatprep.subr.mxu0 0.0
    %155 = vmatpush1.msra.mxu0 0.0
    %156 = vmatprep.subr.mxu0 0.0
    %157 = vmatpush1.msra.mxu0 0.0
    %158 = vmatprep.subr.mxu0 0.0
    %159 = vmatpush1.msra.mxu0 0.0
    %160 = vmatprep.subr.mxu0 0.0
    %161 = vmatpush1.msra.mxu0 0.0
    %162 = vmatprep.subr.mxu0 0.0
    %163 = vmatpush1.msra.mxu0 0.0
    %164 = vmatprep.subr.mxu0 0.0
    %165 = vmatpush1.msra.mxu0 0.0
    %166 = vmatprep.subr.mxu0 0.0
    %167 = vmatpush1.msra.mxu0 0.0
    %168 = vmatprep.subr.mxu0 0.0
    %169 = vmatpush1.msra.mxu0 0.0
    %170 = vmatprep.subr.mxu0 0.0
    %171 = vmatpush1.msra.mxu0 0.0
    %172 = vmatprep.subr.mxu0 0.0
    %173 = vmatpush1.msra.mxu0 0.0
    %174 = vmatprep.subr.mxu0 0.0
    %175 = vmatpush1.msra.mxu0 0.0
    %176 = vmatprep.subr.mxu0 0.0
    %177 = vmatpush1.msra.mxu0 0.0
    %178 = vmatprep.subr.mxu0 0.0
    %179 = vmatpush1.msra.mxu0 0.0
    %180 = vmatprep.subr.mxu0 0.0
    %181 = vmatpush1.msra.mxu0 0.0
    %182 = vmatprep.subr.mxu0 0.0
    %183 = vmatpush1.msra.mxu0 0.0
    %184 = vmatprep.subr.mxu0 0.0
    %185 = vmatpush1.msra.mxu0 0.0
    %186 = vmatprep.subr.mxu0 0.0
    %187 = vmatpush1.msra.mxu0 0.0
    %188 = vmatprep.subr.mxu0 0.0
    %189 = vmatpush1.msra.mxu0 0.0
    %190 = vmatprep.subr.mxu0 0.0
    %191 = vmatpush1.msra.mxu0 0.0
    %192 = vmatprep.subr.mxu0 0.0
    %193 = vmatpush1.msra.mxu0 0.0
    %194 = vmatprep.mubr.f32.mxu0 0.0
    %195 = vmatmul.mubr.f32.gmra.mrb[0].mxu0 %v128
    %v196 = vpop.f32.mrb[0].mxu0
    %v197 = vadd.f32 %v119, %v196
    %v198 = vpop.f32.mrb[0].mxu0
    %v199 = vadd.f32 %v123, %v198
    %200 = vdwg.mxu0
    %v201 = vmax.f32 %v197, 0.0
    %v202 = vmax.f32 %v199, 0.0
    %v203 = vadd.f32 %v201, %v202
    %204 = vadd.xlane.f32.xlu0 %v203
    %v205 = vpop.xlane.xlu0 %204
    %v206 = vmul.f32 %v201, %v201
    %v207 = vmul.f32 %v202, %v202
    %v208 = vadd.f32 %v206, %v207
    %209 = vadd.xlane.f32.xlu0 %v208
    %v210 = vpop.xlane.xlu0 %209
    %v211 = vmul.f32 %v205, 0.00390625
    %v212 = vmul.f32 %v210, 0.00390625
    %v213 = vmul.f32 %v211, %v211
    %v214 = vsub.f32 %v212, %v213
    %v215 = vmax.f32 %v214, 0.0
    %v216 = vsub.f32 %v201, %v211
    %v217 = vsub.f32 %v202, %v211
    %v218 = vadd.f32 %v215, 1e-05
    %v219 = vrsqrt.pop %v218
    %v220 = vmul.f32 %v216, %v219
    %v221 = vmul.f32 %v217, %v219
    %v222 = vld [vmem:[%s3] sm:$0x3]
    %v224 = vlaneseq
    %v225 = vshrl.u32 %v224, 7
    %v226 = vsub.s32 0, %v225
    %v227 = vrot.slane %v222, %v226
    %v228 = vlaneseq
    %v229 = vshrl.u32 %v228, 7
    %v230 = vsub.s32 1, %v229
    %v231 = vrot.slane %v222, %v230
    %v234 = vmul.f32 %v220, %v227
    %v235 = vmul.f32 %v221, %v231
    %v236 = vld [vmem:[%s4] sm:$0x3]
    %v238 = vlaneseq
    %v239 = vshrl.u32 %v238, 7
    %v240 = vsub.s32 0, %v239
    %v241 = vrot.slane %v236, %v240
    %v242 = vlaneseq
    %v243 = vshrl.u32 %v242, 7
    %v244 = vsub.s32 1, %v243
    %v245 = vrot.slane %v236, %v244
    %v248 = vadd.f32 %v234, %v241
    %v249 = vadd.f32 %v235, %v245
    %v250 = vld [vmem:[#allocation7] sm:$0xff]
    %v251 = vld [vmem:[#allocation7 + $0x8] sm:$0xff]
    %v252 = vld [vmem:[#allocation7 + $0x10] sm:$0xff]
    %v253 = vld [vmem:[#allocation7 + $0x18] sm:$0xff]
    %v254 = vld [vmem:[#allocation7 + $0x20] sm:$0xff]
    %v255 = vld [vmem:[#allocation7 + $0x28] sm:$0xff]
    %v256 = vld [vmem:[#allocation7 + $0x30] sm:$0xff]
    %v257 = vld [vmem:[#allocation7 + $0x38] sm:$0xff]
    %v258 = vld [vmem:[#allocation7 + $0x40] sm:$0xff]
    %v259 = vld [vmem:[#allocation7 + $0x48] sm:$0xff]
    %v260 = vld [vmem:[#allocation7 + $0x50] sm:$0xff]
    %v261 = vld [vmem:[#allocation7 + $0x58] sm:$0xff]
    %v262 = vld [vmem:[#allocation7 + $0x60] sm:$0xff]
    %v263 = vld [vmem:[#allocation7 + $0x68] sm:$0xff]
    %v264 = vld [vmem:[#allocation7 + $0x70] sm:$0xff]
    %v265 = vld [vmem:[#allocation7 + $0x78] sm:$0xff]
    %v266 = vld [vmem:[#allocation7 + $0x80] sm:$0xff]
    %v267 = vld [vmem:[#allocation7 + $0x88] sm:$0xff]
    %v268 = vld [vmem:[#allocation7 + $0x90] sm:$0xff]
    %v269 = vld [vmem:[#allocation7 + $0x98] sm:$0xff]
    %v270 = vld [vmem:[#allocation7 + $0xa0] sm:$0xff]
    %v271 = vld [vmem:[#allocation7 + $0xa8] sm:$0xff]
    %v272 = vld [vmem:[#allocation7 + $0xb0] sm:$0xff]
    %v273 = vld [vmem:[#allocation7 + $0xb8] sm:$0xff]
    %v274 = vld [vmem:[#allocation7 + $0xc0] sm:$0xff]
    %v275 = vld [vmem:[#allocation7 + $0xc8] sm:$0xff]
    %v276 = vld [vmem:[#allocation7 + $0xd0] sm:$0xff]
    %v277 = vld [vmem:[#allocation7 + $0xd8] sm:$0xff]
    %v278 = vld [vmem:[#allocation7 + $0xe0] sm:$0xff]
    %v279 = vld [vmem:[#allocation7 + $0xe8] sm:$0xff]
    %v280 = vld [vmem:[#allocation7 + $0xf0] sm:$0xff]
    %v281 = vld [vmem:[#allocation7 + $0xf8] sm:$0xff]
    %v282 = vld [vmem:[#allocation7 + $0x100] sm:$0xff]
    %v283 = vld [vmem:[#allocation7 + $0x108] sm:$0xff]
    %v284 = vld [vmem:[#allocation7 + $0x110] sm:$0xff]
    %v285 = vld [vmem:[#allocation7 + $0x118] sm:$0xff]
    %v286 = vld [vmem:[#allocation7 + $0x120] sm:$0xff]
    %v287 = vld [vmem:[#allocation7 + $0x128] sm:$0xff]
    %v288 = vld [vmem:[#allocation7 + $0x130] sm:$0xff]
    %v289 = vld [vmem:[#allocation7 + $0x138] sm:$0xff]
    %v290 = vld [vmem:[#allocation7 + $0x140] sm:$0xff]
    %v291 = vld [vmem:[#allocation7 + $0x148] sm:$0xff]
    %v292 = vld [vmem:[#allocation7 + $0x150] sm:$0xff]
    %v293 = vld [vmem:[#allocation7 + $0x158] sm:$0xff]
    %v294 = vld [vmem:[#allocation7 + $0x160] sm:$0xff]
    %v295 = vld [vmem:[#allocation7 + $0x168] sm:$0xff]
    %v296 = vld [vmem:[#allocation7 + $0x170] sm:$0xff]
    %v297 = vld [vmem:[#allocation7 + $0x178] sm:$0xff]
    %v298 = vld [vmem:[#allocation7 + $0x180] sm:$0xff]
    %v299 = vld [vmem:[#allocation7 + $0x188] sm:$0xff]
    %v300 = vld [vmem:[#allocation7 + $0x190] sm:$0xff]
    %v301 = vld [vmem:[#allocation7 + $0x198] sm:$0xff]
    %v302 = vld [vmem:[#allocation7 + $0x1a0] sm:$0xff]
    %v303 = vld [vmem:[#allocation7 + $0x1a8] sm:$0xff]
    %v304 = vld [vmem:[#allocation7 + $0x1b0] sm:$0xff]
    %v305 = vld [vmem:[#allocation7 + $0x1b8] sm:$0xff]
    %v306 = vld [vmem:[#allocation7 + $0x1c0] sm:$0xff]
    %v307 = vld [vmem:[#allocation7 + $0x1c8] sm:$0xff]
    %v308 = vld [vmem:[#allocation7 + $0x1d0] sm:$0xff]
    %v309 = vld [vmem:[#allocation7 + $0x1d8] sm:$0xff]
    %v310 = vld [vmem:[#allocation7 + $0x1e0] sm:$0xff]
    %v311 = vld [vmem:[#allocation7 + $0x1e8] sm:$0xff]
    %v312 = vld [vmem:[#allocation7 + $0x1f0] sm:$0xff]
    %v313 = vld [vmem:[#allocation7 + $0x1f8] sm:$0xff]
    %v314 = vld [vmem:[%s6] sm:$0x3]
    %v316 = vlaneseq
    %v317 = vshrl.u32 %v316, 7
    %v318 = vsub.s32 0, %v317
    %v319 = vrot.slane %v314, %v318
    %v320 = vlaneseq
    %v321 = vshrl.u32 %v320, 7
    %v322 = vsub.s32 1, %v321
    %v323 = vrot.slane %v314, %v322
    %326 = vmatprep.subr.mxu0 %v251
    %327 = vmatpush1.msra.mxu0 %v250
    %328 = vmatprep.subr.mxu0 %v253
    %329 = vmatpush1.msra.mxu0 %v252
    %330 = vmatprep.subr.mxu0 %v255
    %331 = vmatpush1.msra.mxu0 %v254
    %332 = vmatprep.subr.mxu0 %v257
    %333 = vmatpush1.msra.mxu0 %v256
    %334 = vmatprep.subr.mxu0 %v259
    %335 = vmatpush1.msra.mxu0 %v258
    %336 = vmatprep.subr.mxu0 %v261
    %337 = vmatpush1.msra.mxu0 %v260
    %338 = vmatprep.subr.mxu0 %v263
    %339 = vmatpush1.msra.mxu0 %v262
    %340 = vmatprep.subr.mxu0 %v265
    %341 = vmatpush1.msra.mxu0 %v264
    %342 = vmatprep.subr.mxu0 %v267
    %343 = vmatpush1.msra.mxu0 %v266
    %344 = vmatprep.subr.mxu0 %v269
    %345 = vmatpush1.msra.mxu0 %v268
    %346 = vmatprep.subr.mxu0 %v271
    %347 = vmatpush1.msra.mxu0 %v270
    %348 = vmatprep.subr.mxu0 %v273
    %349 = vmatpush1.msra.mxu0 %v272
    %350 = vmatprep.subr.mxu0 %v275
    %351 = vmatpush1.msra.mxu0 %v274
    %352 = vmatprep.subr.mxu0 %v277
    %353 = vmatpush1.msra.mxu0 %v276
    %354 = vmatprep.subr.mxu0 %v279
    %355 = vmatpush1.msra.mxu0 %v278
    %356 = vmatprep.subr.mxu0 %v281
    %357 = vmatpush1.msra.mxu0 %v280
    %358 = vmatprep.subr.mxu0 %v283
    %359 = vmatpush1.msra.mxu0 %v282
    %360 = vmatprep.subr.mxu0 %v285
    %361 = vmatpush1.msra.mxu0 %v284
    %362 = vmatprep.subr.mxu0 %v287
    %363 = vmatpush1.msra.mxu0 %v286
    %364 = vmatprep.subr.mxu0 %v289
    %365 = vmatpush1.msra.mxu0 %v288
    %366 = vmatprep.subr.mxu0 %v291
    %367 = vmatpush1.msra.mxu0 %v290
    %368 = vmatprep.subr.mxu0 %v293
    %369 = vmatpush1.msra.mxu0 %v292
    %370 = vmatprep.subr.mxu0 %v295
    %371 = vmatpush1.msra.mxu0 %v294
    %372 = vmatprep.subr.mxu0 %v297
    %373 = vmatpush1.msra.mxu0 %v296
    %374 = vmatprep.subr.mxu0 %v299
    %375 = vmatpush1.msra.mxu0 %v298
    %376 = vmatprep.subr.mxu0 %v301
    %377 = vmatpush1.msra.mxu0 %v300
    %378 = vmatprep.subr.mxu0 %v303
    %379 = vmatpush1.msra.mxu0 %v302
    %380 = vmatprep.subr.mxu0 %v305
    %381 = vmatpush1.msra.mxu0 %v304
    %382 = vmatprep.subr.mxu0 %v307
    %383 = vmatpush1.msra.mxu0 %v306
    %384 = vmatprep.subr.mxu0 %v309
    %385 = vmatpush1.msra.mxu0 %v308
    %386 = vmatprep.subr.mxu0 %v311
    %387 = vmatpush1.msra.mxu0 %v310
    %388 = vmatprep.subr.mxu0 %v313
    %389 = vmatpush1.msra.mxu0 %v312
    %390 = vmatprep.mubr.f32.mxu0 %v249
    %391 = vmatmul.mubr.f32.gmra.mrb[0].mxu0 %v248
    %v392 = vpop.f32.mrb[0].mxu0
    %v393 = vadd.f32 %v319, %v392
    %v394 = vpop.f32.mrb[0].mxu0
    %v395 = vadd.f32 %v323, %v394
    %396 = vdwg.mxu0
    %v397 = vmax.f32 %v393, 0.0
    %v398 = vmax.f32 %v395, 0.0
    %v399 = vld [vmem:[#allocation8] sm:$0xff]
    %v400 = vld [vmem:[#allocation8 + $0x8] sm:$0xff]
    %v401 = vld [vmem:[#allocation8 + $0x10] sm:$0xff]
    %v402 = vld [vmem:[#allocation8 + $0x18] sm:$0xff]
    %v403 = vld [vmem:[#allocation8 + $0x20] sm:$0xff]
    %v404 = vld [vmem:[#allocation8 + $0x28] sm:$0xff]
    %v405 = vld [vmem:[#allocation8 + $0x30] sm:$0xff]
    %v406 = vld [vmem:[#allocation8 + $0x38] sm:$0xff]
    %v407 = vld [vmem:[#allocation8 + $0x40] sm:$0xff]
    %v408 = vld [vmem:[#allocation8 + $0x48] sm:$0xff]
    %v409 = vld [vmem:[#allocation8 + $0x50] sm:$0xff]
    %v410 = vld [vmem:[#allocation8 + $0x58] sm:$0xff]
    %v411 = vld [vmem:[#allocation8 + $0x60] sm:$0xff]
    %v412 = vld [vmem:[#allocation8 + $0x68] sm:$0xff]
    %v413 = vld [vmem:[#allocation8 + $0x70] sm:$0xff]
    %v414 = vld [vmem:[#allocation8 + $0x78] sm:$0xff]
    %v415 = vld [vmem:[#allocation8 + $0x80] sm:$0xff]
    %v416 = vld [vmem:[#allocation8 + $0x88] sm:$0xff]
    %v417 = vld [vmem:[#allocation8 + $0x90] sm:$0xff]
    %v418 = vld [vmem:[#allocation8 + $0x98] sm:$0xff]
    %v419 = vld [vmem:[#allocation8 + $0xa0] sm:$0xff]
    %v420 = vld [vmem:[#allocation8 + $0xa8] sm:$0xff]
    %v421 = vld [vmem:[#allocation8 + $0xb0] sm:$0xff]
    %v422 = vld [vmem:[#allocation8 + $0xb8] sm:$0xff]
    %v423 = vld [vmem:[#allocation8 + $0xc0] sm:$0xff]
    %v424 = vld [vmem:[#allocation8 + $0xc8] sm:$0xff]
    %v425 = vld [vmem:[#allocation8 + $0xd0] sm:$0xff]
    %v426 = vld [vmem:[#allocation8 + $0xd8] sm:$0xff]
    %v427 = vld [vmem:[#allocation8 + $0xe0] sm:$0xff]
    %v428 = vld [vmem:[#allocation8 + $0xe8] sm:$0xff]
    %v429 = vld [vmem:[#allocation8 + $0xf0] sm:$0xff]
    %v430 = vld [vmem:[#allocation8 + $0xf8] sm:$0xff]
    %v431 = vld [vmem:[#allocation8 + $0x100] sm:$0xff]
    %v432 = vld [vmem:[#allocation8 + $0x108] sm:$0xff]
    %v433 = vld [vmem:[#allocation8 + $0x110] sm:$0xff]
    %v434 = vld [vmem:[#allocation8 + $0x118] sm:$0xff]
    %v435 = vld [vmem:[#allocation8 + $0x120] sm:$0xff]
    %v436 = vld [vmem:[#allocation8 + $0x128] sm:$0xff]
    %v437 = vld [vmem:[#allocation8 + $0x130] sm:$0xff]
    %v438 = vld [vmem:[#allocation8 + $0x138] sm:$0xff]
    %v439 = vld [vmem:[#allocation8 + $0x140] sm:$0xff]
    %v440 = vld [vmem:[#allocation8 + $0x148] sm:$0xff]
    %v441 = vld [vmem:[#allocation8 + $0x150] sm:$0xff]
    %v442 = vld [vmem:[#allocation8 + $0x158] sm:$0xff]
    %v443 = vld [vmem:[#allocation8 + $0x160] sm:$0xff]
    %v444 = vld [vmem:[#allocation8 + $0x168] sm:$0xff]
    %v445 = vld [vmem:[#allocation8 + $0x170] sm:$0xff]
    %v446 = vld [vmem:[#allocation8 + $0x178] sm:$0xff]
    %v447 = vld [vmem:[#allocation8 + $0x180] sm:$0xff]
    %v448 = vld [vmem:[#allocation8 + $0x188] sm:$0xff]
    %v449 = vld [vmem:[#allocation8 + $0x190] sm:$0xff]
    %v450 = vld [vmem:[#allocation8 + $0x198] sm:$0xff]
    %v451 = vld [vmem:[#allocation8 + $0x1a0] sm:$0xff]
    %v452 = vld [vmem:[#allocation8 + $0x1a8] sm:$0xff]
    %v453 = vld [vmem:[#allocation8 + $0x1b0] sm:$0xff]
    %v454 = vld [vmem:[#allocation8 + $0x1b8] sm:$0xff]
    %v455 = vld [vmem:[#allocation8 + $0x1c0] sm:$0xff]
    %v456 = vld [vmem:[#allocation8 + $0x1c8] sm:$0xff]
    %v457 = vld [vmem:[#allocation8 + $0x1d0] sm:$0xff]
    %v458 = vld [vmem:[#allocation8 + $0x1d8] sm:$0xff]
    %v459 = vld [vmem:[#allocation8 + $0x1e0] sm:$0xff]
    %v460 = vld [vmem:[#allocation8 + $0x1e8] sm:$0xff]
    %v461 = vld [vmem:[#allocation8 + $0x1f0] sm:$0xff]
    %v462 = vld [vmem:[#allocation8 + $0x1f8] sm:$0xff]
    %v463 = vld [vmem:[%s8] sm:$0x3]
    %v465 = vlaneseq
    %v466 = vshrl.u32 %v465, 7
    %v467 = vsub.s32 0, %v466
    %v468 = vrot.slane %v463, %v467
    %v469 = vlaneseq
    %v470 = vshrl.u32 %v469, 7
    %v471 = vsub.s32 1, %v470
    %v472 = vrot.slane %v463, %v471
    %475 = vmatprep.subr.mxu0 %v400
    %476 = vmatpush1.msra.mxu0 %v399
    %477 = vmatprep.subr.mxu0 %v402
    %478 = vmatpush1.msra.mxu0 %v401
    %479 = vmatprep.subr.mxu0 %v404
    %480 = vmatpush1.msra.mxu0 %v403
    %481 = vmatprep.subr.mxu0 %v406
    %482 = vmatpush1.msra.mxu0 %v405
    %483 = vmatprep.subr.mxu0 %v408
    %484 = vmatpush1.msra.mxu0 %v407
    %485 = vmatprep.subr.mxu0 %v410
    %486 = vmatpush1.msra.mxu0 %v409
    %487 = vmatprep.subr.mxu0 %v412
    %488 = vmatpush1.msra.mxu0 %v411
    %489 = vmatprep.subr.mxu0 %v414
    %490 = vmatpush1.msra.mxu0 %v413
    %491 = vmatprep.subr.mxu0 %v416
    %492 = vmatpush1.msra.mxu0 %v415
    %493 = vmatprep.subr.mxu0 %v418
    %494 = vmatpush1.msra.mxu0 %v417
    %495 = vmatprep.subr.mxu0 %v420
    %496 = vmatpush1.msra.mxu0 %v419
    %497 = vmatprep.subr.mxu0 %v422
    %498 = vmatpush1.msra.mxu0 %v421
    %499 = vmatprep.subr.mxu0 %v424
    %500 = vmatpush1.msra.mxu0 %v423
    %501 = vmatprep.subr.mxu0 %v426
    %502 = vmatpush1.msra.mxu0 %v425
    %503 = vmatprep.subr.mxu0 %v428
    %504 = vmatpush1.msra.mxu0 %v427
    %505 = vmatprep.subr.mxu0 %v430
    %506 = vmatpush1.msra.mxu0 %v429
    %507 = vmatprep.subr.mxu0 %v432
    %508 = vmatpush1.msra.mxu0 %v431
    %509 = vmatprep.subr.mxu0 %v434
    %510 = vmatpush1.msra.mxu0 %v433
    %511 = vmatprep.subr.mxu0 %v436
    %512 = vmatpush1.msra.mxu0 %v435
    %513 = vmatprep.subr.mxu0 %v438
    %514 = vmatpush1.msra.mxu0 %v437
    %515 = vmatprep.subr.mxu0 %v440
    %516 = vmatpush1.msra.mxu0 %v439
    %517 = vmatprep.subr.mxu0 %v442
    %518 = vmatpush1.msra.mxu0 %v441
    %519 = vmatprep.subr.mxu0 %v444
    %520 = vmatpush1.msra.mxu0 %v443
    %521 = vmatprep.subr.mxu0 %v446
    %522 = vmatpush1.msra.mxu0 %v445
    %523 = vmatprep.subr.mxu0 %v448
    %524 = vmatpush1.msra.mxu0 %v447
    %525 = vmatprep.subr.mxu0 %v450
    %526 = vmatpush1.msra.mxu0 %v449
    %527 = vmatprep.subr.mxu0 %v452
    %528 = vmatpush1.msra.mxu0 %v451
    %529 = vmatprep.subr.mxu0 %v454
    %530 = vmatpush1.msra.mxu0 %v453
    %531 = vmatprep.subr.mxu0 %v456
    %532 = vmatpush1.msra.mxu0 %v455
    %533 = vmatprep.subr.mxu0 %v458
    %534 = vmatpush1.msra.mxu0 %v457
    %535 = vmatprep.subr.mxu0 %v460
    %536 = vmatpush1.msra.mxu0 %v459
    %537 = vmatprep.subr.mxu0 %v462
    %538 = vmatpush1.msra.mxu0 %v461
    %539 = vmatprep.mubr.f32.mxu0 %v398
    %540 = vmatmul.mubr.f32.gmra.mrb[0].mxu0 %v397
    %v541 = vpop.f32.mrb[0].mxu0
    %v542 = vadd.f32 %v468, %v541
    %v543 = vpop.f32.mrb[0].mxu0
    %v544 = vadd.f32 %v472, %v543
    %545 = vdwg.mxu0
    %v546 = vmax.f32 %v542, 0.0
    %v547 = vmax.f32 %v544, 0.0
    %v548 = vld [vmem:[#allocation10] sm:$0xff]
    %v549 = vld [vmem:[#allocation10 + $0x8] sm:$0xff]
    %v550 = vld [vmem:[#allocation10 + $0x10] sm:$0xff]
    %v551 = vld [vmem:[#allocation10 + $0x18] sm:$0xff]
    %v552 = vld [vmem:[#allocation10 + $0x20] sm:$0xff]
    %v553 = vld [vmem:[#allocation10 + $0x28] sm:$0xff]
    %v554 = vld [vmem:[#allocation10 + $0x30] sm:$0xff]
    %v555 = vld [vmem:[#allocation10 + $0x38] sm:$0xff]
    %v556 = vld [vmem:[#allocation10 + $0x40] sm:$0xff]
    %v557 = vld [vmem:[#allocation10 + $0x48] sm:$0xff]
    %v558 = vld [vmem:[#allocation10 + $0x50] sm:$0xff]
    %v559 = vld [vmem:[#allocation10 + $0x58] sm:$0xff]
    %v560 = vld [vmem:[#allocation10 + $0x60] sm:$0xff]
    %v561 = vld [vmem:[#allocation10 + $0x68] sm:$0xff]
    %v562 = vld [vmem:[#allocation10 + $0x70] sm:$0xff]
    %v563 = vld [vmem:[#allocation10 + $0x78] sm:$0xff]
    %v564 = vld [vmem:[#allocation10 + $0x80] sm:$0xff]
    %v565 = vld [vmem:[#allocation10 + $0x88] sm:$0xff]
    %v566 = vld [vmem:[#allocation10 + $0x90] sm:$0xff]
    %v567 = vld [vmem:[#allocation10 + $0x98] sm:$0xff]
    %v568 = vld [vmem:[#allocation10 + $0xa0] sm:$0xff]
    %v569 = vld [vmem:[#allocation10 + $0xa8] sm:$0xff]
    %v570 = vld [vmem:[#allocation10 + $0xb0] sm:$0xff]
    %v571 = vld [vmem:[#allocation10 + $0xb8] sm:$0xff]
    %v572 = vld [vmem:[#allocation10 + $0xc0] sm:$0xff]
    %v573 = vld [vmem:[#allocation10 + $0xc8] sm:$0xff]
    %v574 = vld [vmem:[#allocation10 + $0xd0] sm:$0xff]
    %v575 = vld [vmem:[#allocation10 + $0xd8] sm:$0xff]
    %v576 = vld [vmem:[#allocation10 + $0xe0] sm:$0xff]
    %v577 = vld [vmem:[#allocation10 + $0xe8] sm:$0xff]
    %v578 = vld [vmem:[#allocation10 + $0xf0] sm:$0xff]
    %v579 = vld [vmem:[#allocation10 + $0xf8] sm:$0xff]
    %v580 = vld [vmem:[%s10] sm:$0x1]
    %v582 = vlaneseq
    %v583 = vshrl.u32 %v582, 7
    %v584 = vsub.s32 0, %v583
    %v585 = vrot.slane %v580, %v584
    %587 = vmatprep.subr.mxu0 0.0
    %588 = vmatpush1.msra.mxu0 %v548
    %589 = vmatprep.subr.mxu0 0.0
    %590 = vmatpush1.msra.mxu0 %v549
    %591 = vmatprep.subr.mxu0 0.0
    %592 = vmatpush1.msra.mxu0 %v550
    %593 = vmatprep.subr.mxu0 0.0
    %594 = vmatpush1.msra.mxu0 %v551
    %595 = vmatprep.subr.mxu0 0.0
    %596 = vmatpush1.msra.mxu0 %v552
    %597 = vmatprep.subr.mxu0 0.0
    %598 = vmatpush1.msra.mxu0 %v553
    %599 = vmatprep.subr.mxu0 0.0
    %600 = vmatpush1.msra.mxu0 %v554
    %601 = vmatprep.subr.mxu0 0.0
    %602 = vmatpush1.msra.mxu0 %v555
    %603 = vmatprep.subr.mxu0 0.0
    %604 = vmatpush1.msra.mxu0 %v556
    %605 = vmatprep.subr.mxu0 0.0
    %606 = vmatpush1.msra.mxu0 %v557
    %607 = vmatprep.subr.mxu0 0.0
    %608 = vmatpush1.msra.mxu0 %v558
    %609 = vmatprep.subr.mxu0 0.0
    %610 = vmatpush1.msra.mxu0 %v559
    %611 = vmatprep.subr.mxu0 0.0
    %612 = vmatpush1.msra.mxu0 %v560
    %613 = vmatprep.subr.mxu0 0.0
    %614 = vmatpush1.msra.mxu0 %v561
    %615 = vmatprep.subr.mxu0 0.0
    %616 = vmatpush1.msra.mxu0 %v562
    %617 = vmatprep.subr.mxu0 0.0
    %618 = vmatpush1.msra.mxu0 %v563
    %619 = vmatprep.subr.mxu0 0.0
    %620 = vmatpush1.msra.mxu0 %v564
    %621 = vmatprep.subr.mxu0 0.0
    %622 = vmatpush1.msra.mxu0 %v565
    %623 = vmatprep.subr.mxu0 0.0
    %624 = vmatpush1.msra.mxu0 %v566
    %625 = vmatprep.subr.mxu0 0.0
    %626 = vmatpush1.msra.mxu0 %v567
    %627 = vmatprep.subr.mxu0 0.0
    %628 = vmatpush1.msra.mxu0 %v568
    %629 = vmatprep.subr.mxu0 0.0
    %630 = vmatpush1.msra.mxu0 %v569
    %631 = vmatprep.subr.mxu0 0.0
    %632 = vmatpush1.msra.mxu0 %v570
    %633 = vmatprep.subr.mxu0 0.0
    %634 = vmatpush1.msra.mxu0 %v571
    %635 = vmatprep.subr.mxu0 0.0
    %636 = vmatpush1.msra.mxu0 %v572
    %637 = vmatprep.subr.mxu0 0.0
    %638 = vmatpush1.msra.mxu0 %v573
    %639 = vmatprep.subr.mxu0 0.0
    %640 = vmatpush1.msra.mxu0 %v574
    %641 = vmatprep.subr.mxu0 0.0
    %642 = vmatpush1.msra.mxu0 %v575
    %643 = vmatprep.subr.mxu0 0.0
    %644 = vmatpush1.msra.mxu0 %v576
    %645 = vmatprep.subr.mxu0 0.0
    %646 = vmatpush1.msra.mxu0 %v577
    %647 = vmatprep.subr.mxu0 0.0
    %648 = vmatpush1.msra.mxu0 %v578
    %649 = vmatprep.subr.mxu0 0.0
    %650 = vmatpush1.msra.mxu0 %v579
    %651 = vmatprep.mubr.f32.mxu0 %v547
    %652 = vmatmul.mubr.f32.gmra.mrb[0].mxu0 %v546
    %v653 = vpop.f32.mrb[0].mxu0
    %v654 = vadd.f32 %v585, %v653
    %v655 = vpop.f32.mrb[0].mxu0
    %656 = vdwg.mxu0
    %657 = vadd.xlane.f32.xlu0 %v654
    %v658 = vpop.xlane.xlu0 %657
    %v659 = vsub.f32 %v658, %v654
    %v660 = vmul.f32 %v659, 0.125
    %v661 = vsub.f32 %v654, %v660
    %663 = vset.pattern.permute.xlu0 8
    %664 = vperm.xlu0 %663, %v661
    %v665 = vpop.permute.xlu0 %664
    %v667 = vadd.f32 %v654, %v665
    %668 = vst [vmem:[#allocation11] sm:$0xff] %v667
    // Predicated region
    $region66: #{tpu_custom_call.1} parent=1 // pred_check
      _
    $region67: #{tpu_custom_call.1} parent=1 // pred_check_branch
      %670 = sbr.rel (0) target = $region69
    $region68: #{tpu_custom_call.1} parent=1 // pred_region
      %s672 = ssub.s32 128, 128
      %673 = vsyncadd [#allocation4], %s672
      %s675 = sshll.u32 [#allocation11], 4
      %s676 = int_to_ptr.vmem [resolvable:$true] %s675
      %678 = dma.vmem_to_hbm [thread:$0]  %s676, 128, %s11, [#allocation4]
    $region69: #{tpu_custom_call.1} parent=1 // pred_fallthru
      _
    // Predicated region
    $region70: #{tpu_custom_call.1} parent=1 // pred_check
      _
    $region71: #{tpu_custom_call.1} parent=1 // pred_check_branch
      %680 = sbr.rel (0) target = $region73
    $region72: #{tpu_custom_call.1} parent=1 // pred_region
      %681 = dma.done [#allocation4], 128
    $region73: #{tpu_custom_call.1} parent=1 // pred_fallthru
      _
    %682 = vsyncpa [#allocation3], 1
    %683 = vsyncpa [#allocation6], 1
    %684 = vsyncpa [#allocation9], 1
    %685 = vsyncpa [#allocation4], 1

</llo_original>
